<compile_context>
chip_gen: v6e
topology: v6e:2x2x1
jax: 0.10.0
libtpu: 0.0.40
codegen_flags: <defaults>
</compile_context>

<pallas_src>
import jax
import jax.numpy as jnp
from jax.experimental import pallas as pl
from jax.experimental.pallas import tpu as pltpu


def _round_up(x, m):
    return ((x + m - 1) // m) * m


def _wce_kernel(logits_ref, tgt_ref, w_ref, out_ref, num_acc, den_acc):
    """One batch tile: accumulate weighted-CE numerator/denominator partials.

    grid = (n_split [parallel], n_tiles_per_split [arbitrary reduction]).
    out_ref is one (8, 128) block per split: [0, 0] holds the split's numerator,
    [1, 0] its denominator. Padded rows carry target = -1 and contribute zero.
    """
    inner = pl.program_id(1)

    @pl.when(inner == 0)
    def _():
        num_acc[...] = jnp.zeros_like(num_acc)
        den_acc[...] = jnp.zeros_like(den_acc)

    logits = logits_ref[...].astype(jnp.float32)          # (TB, C)
    tgt = tgt_ref[...]                                     # (TB, 1) int32
    w = w_ref[...].astype(jnp.float32)                     # (1, C)

    # numerically stable log-sum-exp per row
    m = jnp.max(logits, axis=-1, keepdims=True)
    lse = m + jnp.log(jnp.sum(jnp.exp(logits - m), axis=-1, keepdims=True))  # (TB, 1)

    # Fused one-hot gather: no float one-hot, no extra (TB,C) multiplies.
    # Padded rows (tgt == -1) match no lane and drop out of both sums.
    col = jax.lax.broadcasted_iota(jnp.int32, logits.shape, 1)               # (TB, C)
    sel = col == tgt                                                         # (TB, C)
    w_b = jnp.broadcast_to(w, logits.shape)                                  # (TB, C)

    num_rows = jnp.sum(jnp.where(sel, (lse - logits) * w_b, 0.0),
                       axis=-1, keepdims=True)                               # (TB, 1)
    den_rows = jnp.sum(jnp.where(sel, w_b, 0.0), axis=-1, keepdims=True)     # (TB, 1)

    # vector-shaped accumulators: no cross-sublane reduce / scalar RMW per step
    num_acc[...] += num_rows
    den_acc[...] += den_rows

    @pl.when(inner == pl.num_programs(1) - 1)
    def _():
        num_s = jnp.sum(num_acc[...])
        den_s = jnp.sum(den_acc[...])
        row = jax.lax.broadcasted_iota(jnp.int32, out_ref.shape, 0)
        out_ref[...] = jnp.where(row == 0, num_s, jnp.where(row == 1, den_s, 0.0))


def _auto_batch_tile(n_rows, n_classes, dtype, n_split,
                     max_tile=512, logits_budget_bytes=8 * 1024 * 1024):
    """Largest batch tile (multiple of 8) whose double-buffered logits tile fits budget."""
    lane_c = _round_up(max(n_classes, 1), 128)            # VMEM tiles are lane-padded to 128
    row_bytes = lane_c * jnp.dtype(dtype).itemsize
    cap = max(8, (logits_budget_bytes // (2 * row_bytes)) // 8 * 8)  # 2 = double buffering
    cap = min(cap, max_tile)
    need = _round_up(pl.cdiv(n_rows, n_split), 8)          # don't over-pad tiny batches
    return max(8, min(cap, need))


def weighted_ce_partials(logits, targets, w, *, batch_tile=None, n_split=2):
    """Weighted cross-entropy partial sums.

    logits : (N, C) float (f32 or bf16; upcast in-kernel)
    targets: (N,)   int class indices
    w      : (C,)   float per-class weights
    Returns (numerator, denominator); loss = numerator / denominator.
    Precondition (as in PyTorch): denominator != 0, i.e. not all selected class
    weights are zero (otherwise the divide yields nan, matching F.cross_entropy).
    """
    N, C = logits.shape
    if batch_tile is None:
        batch_tile = _auto_batch_tile(N, C, logits.dtype, n_split)
    tiles_per_split = pl.cdiv(pl.cdiv(N, batch_tile), n_split)
    n_pad = n_split * tiles_per_split * batch_tile

    targets = targets.astype(jnp.int32)
    pad = n_pad - N
    if pad:
        logits = jnp.pad(logits, ((0, pad), (0, 0)))
        targets = jnp.pad(targets, ((0, pad),), constant_values=-1)  # masked rows
    tgt2d = targets.reshape(n_pad, 1)
    w2d = w.astype(jnp.float32).reshape(1, C)

    out = pl.pallas_call(
        _wce_kernel,
        out_shape=jax.ShapeDtypeStruct((n_split * 8, 128), jnp.float32),
        grid_spec=pltpu.PrefetchScalarGridSpec(
            num_scalar_prefetch=0,
            grid=(n_split, tiles_per_split),
            in_specs=[
                pl.BlockSpec((batch_tile, C),
                             lambda o, i: (o * tiles_per_split + i, 0)),  # logits tile
                pl.BlockSpec((batch_tile, 1),
                             lambda o, i: (o * tiles_per_split + i, 0)),  # targets tile
                pl.BlockSpec((1, C), lambda o, i: (0, 0)),                # class weights
            ],
            out_specs=pl.BlockSpec((8, 128), lambda o, i: (o, 0)),
            scratch_shapes=[
                pltpu.VMEM((batch_tile, 1), jnp.float32),  # numerator partials
                pltpu.VMEM((batch_tile, 1), jnp.float32),  # denominator partials
            ],
        ),
        compiler_params=pltpu.CompilerParams(
            dimension_semantics=("parallel", "arbitrary"),  # split batch across TCs (v7x)
            vmem_limit_bytes=32 * 1024 * 1024,
        ),
    )(logits, tgt2d, w2d)

    out = out.reshape(n_split, 8, 128)
    return jnp.sum(out[:, 0, 0]), jnp.sum(out[:, 1, 0])


def weighted_triple_ce(y_pred, y_true, w1, w2, w3, weights=(2.0, 1.0, 1.0),
                       *, batch_tile=None, n_split=2):
    """Forward pass of WeightedTripleCE. y_pred = (p1, p2, p3); y_true dict of targets."""
    hw = jnp.asarray(weights, jnp.float32)
    hw = hw / jnp.sum(hw)

    preds = list(y_pred)
    targets = [y_true["grapheme_root"], y_true["vowel_diacritic"],
               y_true["consonant_diacritic"]]
    class_ws = [w1, w2, w3]

    total = jnp.float32(0.0)
    for k in range(3):
        C = preds[k].shape[1]
        if class_ws[k] is None:
            wk = jnp.ones((C,), jnp.float32)     # weight=None -> plain mean CE
        else:
            wk = jnp.asarray(class_ws[k], jnp.float32)
            wk = wk / jnp.sum(wk)                # module normalizes w_k (no effect on CE value)
        num, den = weighted_ce_partials(preds[k], targets[k], wk,
                                        batch_tile=batch_tile, n_split=n_split)
        total = total + hw[k] * (num / den)
    return total


def _reference(y_pred, y_true, w1, w2, w3, weights=(2.0, 1.0, 1.0)):
    hw = jnp.asarray(weights, jnp.float32)
    hw = hw / jnp.sum(hw)
    targets = [y_true["grapheme_root"], y_true["vowel_diacritic"],
               y_true["consonant_diacritic"]]
    class_ws = [w1, w2, w3]
    total = jnp.float32(0.0)
    for k in range(3):
        logits = y_pred[k].astype(jnp.float32)
        t = targets[k].astype(jnp.int32)
        C = logits.shape[1]
        w = (jnp.ones((C,), jnp.float32) if class_ws[k] is None
             else jnp.asarray(class_ws[k], jnp.float32))
        w = w / jnp.sum(w)
        lse = jax.nn.logsumexp(logits, axis=-1)
        picked = jnp.take_along_axis(logits, t[:, None], axis=-1)[:, 0]
        wi = w[t]
        total = total + hw[k] * (jnp.sum(wi * (lse - picked)) / jnp.sum(wi))
    return total


if __name__ == "__main__":
    key = jax.random.PRNGKey(0)
    N = 37                     # deliberately not a multiple of the tile -> exercises masking
    C1, C2, C3 = 40, 11, 7     # small grapheme_root / vowel / consonant class counts
    ks = jax.random.split(key, 6)

    # bf16 logits (model-native); the kernel upcasts to f32 internally
    p1 = jax.random.normal(ks[0], (N, C1), jnp.float32).astype(jnp.bfloat16)
    p2 = jax.random.normal(ks[1], (N, C2), jnp.float32).astype(jnp.bfloat16)
    p3 = jax.random.normal(ks[2], (N, C3), jnp.float32).astype(jnp.bfloat16)
    t1 = jax.random.randint(ks[3], (N,), 0, C1, jnp.int32)
    t2 = jax.random.randint(ks[4], (N,), 0, C2, jnp.int32)
    t3 = jax.random.randint(ks[5], (N,), 0, C3, jnp.int32)

    w1 = 0.5 + 0.05 * jnp.arange(C1, dtype=jnp.float32)
    w2 = 1.0 + 0.10 * jnp.arange(C2, dtype=jnp.float32)
    w3 = None                                   # exercises the weight=None head

    y_pred = (p1, p2, p3)
    y_true = {"grapheme_root": t1, "vowel_diacritic": t2, "consonant_diacritic": t3}

    loss = weighted_triple_ce(y_pred, y_true, w1, w2, w3, weights=(2.0, 1.0, 1.0))
    loss = jax.block_until_ready(loss)

    ref = _reference(y_pred, y_true, w1, w2, w3, weights=(2.0, 1.0, 1.0))
    assert jnp.allclose(loss, ref, rtol=1e-4, atol=1e-4), (loss, ref)
    print("KERNEL_OK")
</pallas_src>

<mosaic_0001>
module attributes {stable_mosaic.version = 11 : i64} {
  func.func @_wce_kernel(%arg0: i32, %arg1: i32, %arg2: memref<24x40xbf16, #tpu.memory_space<vmem>>, %arg3: memref<24x1xi32, #tpu.memory_space<vmem>>, %arg4: memref<1x40xf32, #tpu.memory_space<vmem>>, %arg5: memref<8x128xf32, #tpu.memory_space<vmem>>, %arg6: memref<24x1xf32, #tpu.memory_space<vmem>>, %arg7: memref<24x1xf32, #tpu.memory_space<vmem>>) attributes {dimension_semantics = [#tpu.dimension_semantics<parallel>, #tpu.dimension_semantics<arbitrary>], iteration_bounds = array<i64: 2, 1>, scalar_prefetch = 0 : i64, scratch_operands = 2 : i64, tpu.core_type = #tpu.core_type<tc>, window_params = [{transform_indices = @transform_0, window_bounds = array<i64: 24, 40>}, {transform_indices = @transform_1, window_bounds = array<i64: 24, 1>}, {pipeline_mode = #tpu.pipeline_mode<synchronous>, transform_indices = @transform_2, window_bounds = array<i64: 1, 40>}, {transform_indices = @transform_3, window_bounds = array<i64: 8, 128>}]} {
    %c0_i32 = arith.constant 0 : i32
    %0 = arith.cmpi eq, %arg1, %c0_i32 : i32
    %1 = arith.extui %0 : i1 to i32
    %c0_i32_0 = arith.constant 0 : i32
    %2 = arith.cmpi ne, %1, %c0_i32_0 : i32
    scf.if %2 {
      %cst_21 = arith.constant 0.000000e+00 : f32
      %41 = vector.broadcast %cst_21 : f32 to vector<24x1xf32>
      %c0_22 = arith.constant 0 : index
      %c0_23 = arith.constant 0 : index
      %42 = vector.load %arg6[%c0_22, %c0_23] : memref<24x1xf32, #tpu.memory_space<vmem>>, vector<24x1xf32>
      tpu.vector_store %arg6[%c0_22, %c0_23], %41 {strides = array<i32>} : memref<24x1xf32, #tpu.memory_space<vmem>>, vector<24x1xf32>,
      %cst_24 = arith.constant 0.000000e+00 : f32
      %43 = vector.broadcast %cst_24 : f32 to vector<24x1xf32>
      %c0_25 = arith.constant 0 : index
      %c0_26 = arith.constant 0 : index
      %44 = vector.load %arg7[%c0_25, %c0_26] : memref<24x1xf32, #tpu.memory_space<vmem>>, vector<24x1xf32>
      tpu.vector_store %arg7[%c0_25, %c0_26], %43 {strides = array<i32>} : memref<24x1xf32, #tpu.memory_space<vmem>>, vector<24x1xf32>,
    } else {
    }
    %c0 = arith.constant 0 : index
    %c0_1 = arith.constant 0 : index
    %3 = vector.load %arg2[%c0, %c0_1] : memref<24x40xbf16, #tpu.memory_space<vmem>>, vector<24x40xbf16>
    %4 = arith.extf %3 : vector<24x40xbf16> to vector<24x40xf32>
    %c0_2 = arith.constant 0 : index
    %c0_3 = arith.constant 0 : index
    %5 = vector.load %arg3[%c0_2, %c0_3] : memref<24x1xi32, #tpu.memory_space<vmem>>, vector<24x1xi32>
    %c0_4 = arith.constant 0 : index
    %c0_5 = arith.constant 0 : index
    %6 = vector.load %arg4[%c0_4, %c0_5] : memref<1x40xf32, #tpu.memory_space<vmem>>, vector<1x40xf32>
    %cst = arith.constant dense<0xFF800000> : vector<24xf32>
    %7 = vector.multi_reduction <maximumf>, %4, %cst [1] : vector<24x40xf32> to vector<24xf32>
    %8 = vector.shape_cast %7 : vector<24xf32> to vector<24x1xf32>
    %9 = vector.broadcast %8 : vector<24x1xf32> to vector<24x40xf32>
    %10 = arith.subf %4, %9 : vector<24x40xf32>
    %11 = math.exp %10 : vector<24x40xf32>
    %cst_6 = arith.constant dense<0.000000e+00> : vector<24xf32>
    %12 = vector.multi_reduction <add>, %11, %cst_6 [1] : vector<24x40xf32> to vector<24xf32>
    %13 = vector.shape_cast %12 : vector<24xf32> to vector<24x1xf32>
    %14 = math.log %13 : vector<24x1xf32>
    %15 = arith.addf %8, %14 : vector<24x1xf32>
    %16 = tpu.iota {dimensions = array<i32: 1>} : vector<24x40xi32>
    %17 = vector.broadcast %5 : vector<24x1xi32> to vector<24x40xi32>
    %18 = arith.cmpi eq, %16, %17 : vector<24x40xi32>
    %19 = vector.shape_cast %6 : vector<1x40xf32> to vector<1x40xf32>
    %20 = vector.broadcast %19 : vector<1x40xf32> to vector<24x40xf32>
    %21 = vector.broadcast %15 : vector<24x1xf32> to vector<24x40xf32>
    %22 = arith.subf %21, %4 : vector<24x40xf32>
    %23 = arith.mulf %22, %20 : vector<24x40xf32>
    %cst_7 = arith.constant 0.000000e+00 : f32
    %24 = vector.broadcast %cst_7 : f32 to vector<24x40xf32>
    %25 = arith.select %18, %23, %24 : vector<24x40xi1>, vector<24x40xf32>
    %cst_8 = arith.constant dense<0.000000e+00> : vector<24xf32>
    %26 = vector.multi_reduction <add>, %25, %cst_8 [1] : vector<24x40xf32> to vector<24xf32>
    %27 = vector.shape_cast %26 : vector<24xf32> to vector<24x1xf32>
    %cst_9 = arith.constant 0.000000e+00 : f32
    %28 = vector.broadcast %cst_9 : f32 to vector<24x40xf32>
    %29 = arith.select %18, %20, %28 : vector<24x40xi1>, vector<24x40xf32>
    %cst_10 = arith.constant dense<0.000000e+00> : vector<24xf32>
    %30 = vector.multi_reduction <add>, %29, %cst_10 [1] : vector<24x40xf32> to vector<24xf32>
    %31 = vector.shape_cast %30 : vector<24xf32> to vector<24x1xf32>
    %c0_11 = arith.constant 0 : index
    %c0_12 = arith.constant 0 : index
    %32 = vector.load %arg6[%c0_11, %c0_12] : memref<24x1xf32, #tpu.memory_space<vmem>>, vector<24x1xf32>
    %33 = arith.addf %32, %27 : vector<24x1xf32>
    %c0_13 = arith.constant 0 : index
    %c0_14 = arith.constant 0 : index
    %34 = vector.load %arg6[%c0_13, %c0_14] : memref<24x1xf32, #tpu.memory_space<vmem>>, vector<24x1xf32>
    tpu.vector_store %arg6[%c0_13, %c0_14], %33 {strides = array<i32>} : memref<24x1xf32, #tpu.memory_space<vmem>>, vector<24x1xf32>,
    %c0_15 = arith.constant 0 : index
    %c0_16 = arith.constant 0 : index
    %35 = vector.load %arg7[%c0_15, %c0_16] : memref<24x1xf32, #tpu.memory_space<vmem>>, vector<24x1xf32>
    %36 = arith.addf %35, %31 : vector<24x1xf32>
    %c0_17 = arith.constant 0 : index
    %c0_18 = arith.constant 0 : index
    %37 = vector.load %arg7[%c0_17, %c0_18] : memref<24x1xf32, #tpu.memory_space<vmem>>, vector<24x1xf32>
    tpu.vector_store %arg7[%c0_17, %c0_18], %36 {strides = array<i32>} : memref<24x1xf32, #tpu.memory_space<vmem>>, vector<24x1xf32>,
    %c0_i32_19 = arith.constant 0 : i32
    %38 = arith.cmpi eq, %arg1, %c0_i32_19 : i32
    %39 = arith.extui %38 : i1 to i32
    %c0_i32_20 = arith.constant 0 : i32
    %40 = arith.cmpi ne, %39, %c0_i32_20 : i32
    scf.if %40 {
      %c0_21 = arith.constant 0 : index
      %c0_22 = arith.constant 0 : index
      %41 = vector.load %arg6[%c0_21, %c0_22] : memref<24x1xf32, #tpu.memory_space<vmem>>, vector<24x1xf32>
      %42 = vector.shape_cast %41 : vector<24x1xf32> to vector<1x24x1xf32>
      %cst_23 = arith.constant dense<0.000000e+00> : vector<1xf32>
      %43 = vector.multi_reduction <add>, %42, %cst_23 [1, 2] : vector<1x24x1xf32> to vector<1xf32>
      %44 = vector.shape_cast %43 : vector<1xf32> to vector<1x1x1xf32>
      %45 = vector.extract %44[0, 0, 0] : f32 from vector<1x1x1xf32>
      %c0_24 = arith.constant 0 : index
      %c0_25 = arith.constant 0 : index
      %46 = vector.load %arg7[%c0_24, %c0_25] : memref<24x1xf32, #tpu.memory_space<vmem>>, vector<24x1xf32>
      %47 = vector.shape_cast %46 : vector<24x1xf32> to vector<1x24x1xf32>
      %cst_26 = arith.constant dense<0.000000e+00> : vector<1xf32>
      %48 = vector.multi_reduction <add>, %47, %cst_26 [1, 2] : vector<1x24x1xf32> to vector<1xf32>
      %49 = vector.shape_cast %48 : vector<1xf32> to vector<1x1x1xf32>
      %50 = vector.extract %49[0, 0, 0] : f32 from vector<1x1x1xf32>
      %51 = tpu.iota {dimensions = array<i32: 0>} : vector<8x128xi32>
      %c0_i32_27 = arith.constant 0 : i32
      %52 = vector.broadcast %c0_i32_27 : i32 to vector<8x128xi32>
      %53 = arith.cmpi eq, %51, %52 : vector<8x128xi32>
      %c1_i32 = arith.constant 1 : i32
      %54 = vector.broadcast %c1_i32 : i32 to vector<8x128xi32>
      %55 = arith.cmpi eq, %51, %54 : vector<8x128xi32>
      %cst_28 = arith.constant 0.000000e+00 : f32
      %56 = vector.broadcast %50 : f32 to vector<8x128xf32>
      %57 = vector.broadcast %cst_28 : f32 to vector<8x128xf32>
      %58 = arith.select %55, %56, %57 : vector<8x128xi1>, vector<8x128xf32>
      %59 = vector.broadcast %45 : f32 to vector<8x128xf32>
      %60 = arith.select %53, %59, %58 : vector<8x128xi1>, vector<8x128xf32>
      %c0_29 = arith.constant 0 : index
      %c0_30 = arith.constant 0 : index
      %61 = vector.load %arg5[%c0_29, %c0_30] : memref<8x128xf32, #tpu.memory_space<vmem>>, vector<8x128xf32>
      tpu.vector_store %arg5[%c0_29, %c0_30], %60 {strides = array<i32>} : memref<8x128xf32, #tpu.memory_space<vmem>>, vector<8x128xf32>,
    } else {
    }
    return
  }
  func.func @transform_0(%arg0: i32, %arg1: i32) -> (i32, i32) {
    %c1_i32 = arith.constant 1 : i32
    %0 = arith.muli %arg0, %c1_i32 : i32
    %1 = arith.addi %0, %arg1 : i32
    %c0_i32 = arith.constant 0 : i32
    %c0_i32_0 = arith.constant 0 : i32
    return %1, %c0_i32 : i32, i32
  }
  func.func @transform_1(%arg0: i32, %arg1: i32) -> (i32, i32) {
    %c1_i32 = arith.constant 1 : i32
    %0 = arith.muli %arg0, %c1_i32 : i32
    %1 = arith.addi %0, %arg1 : i32
    %c0_i32 = arith.constant 0 : i32
    %c0_i32_0 = arith.constant 0 : i32
    return %1, %c0_i32 : i32, i32
  }
  func.func @transform_2(%arg0: i32, %arg1: i32) -> (i32, i32) {
    %c0_i32 = arith.constant 0 : i32
    %c0_i32_0 = arith.constant 0 : i32
    %c0_i32_1 = arith.constant 0 : i32
    return %c0_i32, %c0_i32_0 : i32, i32
  }
  func.func @transform_3(%arg0: i32, %arg1: i32) -> (i32, i32) {
    %c0_i32 = arith.constant 0 : i32
    %c0_i32_0 = arith.constant 0 : i32
    return %arg0, %c0_i32 : i32, i32
  }
}

</mosaic_0001>

<llo_original>
// kernel: tpu_custom_call.1
$region0: #{tpu_custom_call.1}
  #allocation0 [shape = 'u32[]', space=smem, size = 0x4, offset = 0x4, fixed_abs, tag = 'smem constant byte address 0x4 - core index']
  #allocation1 [shape = 'u32[144,128]{1,0:T(1,128)}', space=vmem, size = 0x12000, scoped, tag = 'internal scratch']
  #allocation2 [shape = 'f32[24,1]{1,0:T(8,128)}', space=vmem, size = 0x3000, scoped, tag = 'scratch operand']
  #allocation3 [shape = 'f32[24,1]{1,0:T(8,128)}', space=vmem, size = 0x3000, scoped, tag = 'scratch operand']
  %s0 = inlined_call_operand.vmem [shape: bf16[48,40], index: 0, kind: input, shape index: {}]
  %s1 = inlined_call_operand.vmem [shape: s32[48,1], index: 1, kind: input, shape index: {}]
  %s2 = inlined_call_operand.vmem [shape: f32[1,40], index: 2, kind: input, shape index: {}]
  %s3 = inlined_call_operand.hbm [shape: f32[16,128], index: 3, kind: output, shape index: {}]
  %s4 = sld [smem:[#allocation0]]
  $region53: #{tpu_custom_call.1} parent=0
    _
  %s6 = ssub.s32 1, %s4
  %s7 = scalar_select 0, %s6, %s4
  $region1: #{tpu_custom_call.1} parent=0
    #allocation4 [shape = 'u8[8192]{0}', space=vmem, size = 0x2000, scoped, tag = 'output window, operand 0']
    #allocation5 [shape = 's32[2]{0}', space=sflag, size = 0x8, scoped, tag = 'scoped memory for tpu_custom_call.1']
    %8 = vsyncpa [#allocation5], 0
    %s9 = scalar_lea.sflag [#allocation5], 1
    %10 = vsyncpa %s9, 0
    loop: start=0, step=1, limit=4
    $region2: #{tpu_custom_call.1} parent=1 // loop_pre_header
      _
    $region3: #{tpu_custom_call.1} parent=1 // loop_header
      %s12 = sphi 0, %s16
      %p13 = scmp.ge.s32.totalorder %s12, 4
      %s19 = sphi 0, %s31
      %s20 = sphi 0, %s27
      %s21 = sphi 0, %s19
      %s22 = sphi 0, %s20
      %s23 = sphi 0, %s21
      %s24 = sphi 0, %s22
      %s36 = sphi 0, %s38
      %s39 = sphi 0, %s36
      %s40 = sphi 0, %s39
      %s56 = sphi 0, %s40
      %s64 = sphi 0, %s66
      %s67 = sphi 0, %s64
      %s68 = sphi 0, %s67
      %s84 = sphi 0, %s68
      %s88 = sphi 0, %s88
      %s90 = sphi 0, %s88
      %s91 = sphi 0, %s90
      %s105 = sphi 0, %s91
      %s111 = sphi 0, %s113
      %s114 = sphi 0, %s111
      %s115 = sphi 0, %s114
      %s131 = sphi 0, %s115
    $region4: #{tpu_custom_call.1} parent=1 // loop_header_branch
      %15 = sbr.rel (%p13) target = $region8
    $region5: #{tpu_custom_call.1} parent=1 // loop_body
      %s17 = ssub.s32 %s12, 1
      %s18 = ssub.s32 %s12, 2
      %s25 = sadd.s32 1, %s20
      %p26 = scmp.ge.s32.totalorder %s25, 1
      %s27 = scalar_select %p26, 0, %s25
      %s28 = sadd.s32 1, %s19
      %s29 = scalar_select %p26, %s28, %s19
      %p30 = scmp.ge.s32.totalorder %s29, 2
      %s31 = scalar_select %p30, 0, %s29
      %s32 = sadd.s32 %s19, %s20
      %s33 = sadd.s32 %s31, %s27
      %s34 = ssub.s32 %s32, %s33
      %p35 = scmp.eq.s32.totalorder %s34, 0
      %s37 = sadd.s32 %s36, 1
      %s38 = scalar_select %p35, %s36, %s37
      %p41 = pneg %p35
      %p42 = scmp.eq.s32.totalorder %s12, 1
      %p43 = por %p41, %p42
      %p44 = scmp.ne.s32.totalorder %s36, %s39
      %p45 = scmp.eq.s32.totalorder %s12, 0
      %p46 = por %p44, %p45
      %p47 = scmp.ne.s32.totalorder %s36, %s39
      %p48 = scmp.eq.s32.totalorder %s17, 1
      %p49 = por %p47, %p48
      %p50 = scmp.ne.s32.totalorder %s39, %s40
      %p51 = scmp.eq.s32.totalorder %s17, 0
      %p52 = por %p50, %p51
      %p53 = scmp.ne.s32.totalorder %s39, %s40
      %p54 = scmp.eq.s32.totalorder %s18, 1
      %p55 = por %p53, %p54
      %p57 = scmp.ne.s32.totalorder %s40, %s56
      %p58 = scmp.eq.s32.totalorder %s18, 0
      %p59 = por %p57, %p58
      %s60 = sadd.s32 %s19, %s20
      %s61 = sadd.s32 %s31, %s27
      %s62 = ssub.s32 %s60, %s61
      %p63 = scmp.eq.s32.totalorder %s62, 0
      %s65 = sadd.s32 %s64, 1
      %s66 = scalar_select %p63, %s64, %s65
      %p69 = pneg %p63
      %p70 = scmp.eq.s32.totalorder %s12, 1
      %p71 = por %p69, %p70
      %p72 = scmp.ne.s32.totalorder %s64, %s67
      %p73 = scmp.eq.s32.totalorder %s12, 0
      %p74 = por %p72, %p73
      %p75 = scmp.ne.s32.totalorder %s64, %s67
      %p76 = scmp.eq.s32.totalorder %s17, 1
      %p77 = por %p75, %p76
      %p78 = scmp.ne.s32.totalorder %s67, %s68
      %p79 = scmp.eq.s32.totalorder %s17, 0
      %p80 = por %p78, %p79
      %p81 = scmp.ne.s32.totalorder %s67, %s68
      %p82 = scmp.eq.s32.totalorder %s18, 1
      %p83 = por %p81, %p82
      %p85 = scmp.ne.s32.totalorder %s68, %s84
      %p86 = scmp.eq.s32.totalorder %s18, 0
      %p87 = por %p85, %p86
      %s89 = sadd.s32 %s88, 1
      %p92 = scmp.eq.s32.totalorder %s12, 1
      %p93 = scmp.ne.s32.totalorder %s88, %s90
      %p94 = scmp.eq.s32.totalorder %s12, 0
      %p95 = por %p93, %p94
      %p96 = scmp.ne.s32.totalorder %s88, %s90
      %p97 = scmp.eq.s32.totalorder %s17, 1
      %p98 = por %p96, %p97
      %p99 = scmp.ne.s32.totalorder %s90, %s91
      %p100 = scmp.eq.s32.totalorder %s17, 0
      %p101 = por %p99, %p100
      %p102 = scmp.ne.s32.totalorder %s90, %s91
      %p103 = scmp.eq.s32.totalorder %s18, 1
      %p104 = por %p102, %p103
      %p106 = scmp.ne.s32.totalorder %s91, %s105
      %p107 = scmp.eq.s32.totalorder %s18, 0
      %p108 = por %p106, %p107
      %s109 = ssub.s32 %s19, %s31
      %p110 = scmp.eq.s32.totalorder %s109, 0
      %s112 = sadd.s32 %s111, 1
      %s113 = scalar_select %p110, %s111, %s112
      %p116 = pneg %p110
      %p117 = scmp.eq.s32.totalorder %s12, 1
      %p118 = por %p116, %p117
      %p119 = scmp.ne.s32.totalorder %s111, %s114
      %p120 = scmp.eq.s32.totalorder %s12, 0
      %p121 = por %p119, %p120
      %p122 = scmp.ne.s32.totalorder %s111, %s114
      %p123 = scmp.eq.s32.totalorder %s17, 1
      %p124 = por %p122, %p123
      %p125 = scmp.ne.s32.totalorder %s114, %s115
      %p126 = scmp.eq.s32.totalorder %s17, 0
      %p127 = por %p125, %p126
      %p128 = scmp.ne.s32.totalorder %s114, %s115
      %p129 = scmp.eq.s32.totalorder %s18, 1
      %p130 = por %p128, %p129
      %p132 = scmp.ne.s32.totalorder %s115, %s131
      %p133 = scmp.eq.s32.totalorder %s18, 0
      %p134 = por %p132, %p133
      %p135 = scmp.le.s32.totalorder 1, %s12
      %p136 = scmp.lt.s32.totalorder %s12, 3
      %p137 = pnand %p135, %p136
      %p138 = pneg %p137
      // Predicated region
      $region9: #{tpu_custom_call.1} parent=5 // pred_check
        _
      $region10: #{tpu_custom_call.1} parent=5 // pred_check_branch
        %140 = sbr.rel (%p137) target = $region12
      $region11: #{tpu_custom_call.1} parent=5 // pred_region
        %s141 = ssub.s32 %s12, 1
        // Predicated region
        $region13: #{tpu_custom_call.1} parent=11 // pred_check
          %p142 = pneg %p101
        $region14: #{tpu_custom_call.1} parent=11 // pred_check_branch
          %144 = sbr.rel (%p142) target = $region16
        $region15: #{tpu_custom_call.1} parent=11 // pred_region
          _
        $region16: #{tpu_custom_call.1} parent=11 // pred_fallthru
          _
      $region12: #{tpu_custom_call.1} parent=5 // pred_fallthru
        _
      %p145 = scmp.lt.s32.totalorder %s12, 2
      // Predicated region
      $region17: #{tpu_custom_call.1} parent=5 // pred_check
        %p146 = pneg %p145
      $region18: #{tpu_custom_call.1} parent=5 // pred_check_branch
        %148 = sbr.rel (%p146) target = $region20
      $region19: #{tpu_custom_call.1} parent=5 // pred_region
        // Predicated region
        $region21: #{tpu_custom_call.1} parent=19 // pred_check
          %p149 = pneg %p46
        $region22: #{tpu_custom_call.1} parent=19 // pred_check_branch
          %151 = sbr.rel (%p149) target = $region24
        $region23: #{tpu_custom_call.1} parent=19 // pred_region
          %s152 = sadd.s32 %s19, %s20
          %s153 = smul.u32 3, %s152
          %p154 = scmp.lt.s32.totalorder %s153, 5
          %s155 = scalar_select %p154, %s153, 5
          %s156 = smul.addr %s155, 4
          %s157 = scalar_lea.vmem %s0, %s156
          %s158 = sadd.s32 %s19, %s20
          %s159 = smul.u32 3, %s158
        $region24: #{tpu_custom_call.1} parent=19 // pred_fallthru
          _
        // Predicated region
        $region25: #{tpu_custom_call.1} parent=19 // pred_check
          %p160 = pneg %p74
        $region26: #{tpu_custom_call.1} parent=19 // pred_check_branch
          %162 = sbr.rel (%p160) target = $region28
        $region27: #{tpu_custom_call.1} parent=19 // pred_region
          %s163 = sadd.s32 %s19, %s20
          %s164 = smul.u32 3, %s163
          %p165 = scmp.lt.s32.totalorder %s164, 5
          %s166 = scalar_select %p165, %s164, 5
          %s167 = smul.addr %s166, 8
          %s168 = scalar_lea.vmem %s1, %s167
          %s169 = sadd.s32 %s19, %s20
          %s170 = smul.u32 3, %s169
        $region28: #{tpu_custom_call.1} parent=19 // pred_fallthru
          _
      $region20: #{tpu_custom_call.1} parent=5 // pred_fallthru
        _
      %p171 = scmp.le.s32.totalorder 1, %s12
      %p172 = scmp.lt.s32.totalorder %s12, 3
      %p173 = pnand %p171, %p172
      %p174 = pneg %p173
      // Predicated region
      $region29: #{tpu_custom_call.1} parent=5 // pred_check
        _
      $region30: #{tpu_custom_call.1} parent=5 // pred_check_branch
        %176 = sbr.rel (%p173) target = $region32
      $region31: #{tpu_custom_call.1} parent=5 // pred_region
        %s177 = ssub.s32 %s12, 1
        %s178 = sadd.s32 %s21, %s22
        %s179 = smul.u32 3, %s178
        %p180 = scmp.lt.s32.totalorder %s179, 5
        %s181 = scalar_select %p180, %s179, 5
        %s182 = smul.addr %s181, 4
        %s183 = scalar_lea.vmem %s0, %s182
        %p184 = pneg %p52
        %p185 = pneg %p49
        %s186 = sadd.s32 %s21, %s22
        %s187 = smul.u32 3, %s186
        %p188 = scmp.lt.s32.totalorder %s187, 5
        %s189 = scalar_select %p188, %s187, 5
        %s190 = smul.addr %s189, 8
        %s191 = scalar_lea.vmem %s1, %s190
        %p192 = pneg %p80
        %p193 = pneg %p77
        %p194 = pneg %p101
        %p195 = pneg %p98
        %p196 = pneg %p127
        %p197 = pneg %p124
        %s198 = sand.u32 %s114, 1
        %s199 = scalar_lea.sflag [#allocation5], %s198
        %s200 = sand.u32 %s114, 1
        %s201 = smul.addr %s200, 8
        %s202 = scalar_lea.vmem [#allocation4], %s201
        %s203 = sadd.s32 %s21, %s22
        %s204 = smul.u32 3, %s203
        %p205 = scmp.lt.s32.totalorder %s204, 5
        %s206 = scalar_select %p205, %s204, 5
        %s207 = smul.addr %s206, 4
        %s208 = scalar_lea.vmem %s0, %s207
        %s209 = sadd.s32 %s21, %s22
        %s210 = smul.u32 3, %s209
        %s211 = sadd.s32 %s21, %s22
        %s212 = smul.u32 3, %s211
        %p213 = scmp.lt.s32.totalorder %s212, 5
        %s214 = scalar_select %p213, %s212, 5
        %s215 = smul.addr %s214, 8
        %s216 = scalar_lea.vmem %s1, %s215
        %s217 = sadd.s32 %s21, %s22
        %s218 = smul.u32 3, %s217
        %p219 = scmp.eq.s32.totalorder %s22, 0
        // Predicated region
        $region33: #{tpu_custom_call.1} parent=31 // pred_check
          %p220 = pneg %p219
        $region34: #{tpu_custom_call.1} parent=31 // pred_check_branch
          %222 = sbr.rel (%p220) target = $region36
        $region35: #{tpu_custom_call.1} parent=31 // pred_region
          %vm223 = vcmask 7168
          %224 = vst.msk [vmem:[#allocation2] sm:$0xff] %vm223, 0.0
          %225 = vst.msk [vmem:[#allocation2 + $0x8] sm:$0xff] %vm223, 0.0
          %226 = vst.msk [vmem:[#allocation2 + $0x10] sm:$0xff] %vm223, 0.0
          %227 = vst.msk [vmem:[#allocation3] sm:$0xff] %vm223, 0.0
          %228 = vst.msk [vmem:[#allocation3 + $0x8] sm:$0xff] %vm223, 0.0
          %229 = vst.msk [vmem:[#allocation3 + $0x10] sm:$0xff] %vm223, 0.0
        $region36: #{tpu_custom_call.1} parent=31 // pred_fallthru
          _
        %v230 = vld [vmem:[%s208] sm:$0xf]
        %v231 = vld [vmem:[%s208 + $0x4] sm:$0xf]
        %v232 = vld [vmem:[%s208 + $0x8] sm:$0xf]
        %v233 = vunpack.c.l.bf16 %v230
        %v234 = vunpack.c.l.bf16 %v231
        %v235 = vunpack.c.l.bf16 %v232
        %v236 = vld [vmem:[%s216] sm:$0xff]
        %v237 = vld [vmem:[%s216 + $0x8] sm:$0xff]
        %v238 = vld [vmem:[%s216 + $0x10] sm:$0xff]
        %v239 = vld [vmem:[%s2] sm:$0x1]
        %vm240 = vcmask 326656
        %v241 = vsel %vm240, %v233, -inf
        %242 = vmax.xlane.f32.xlu0 %v241
        %v243 = vpop.xlane.xlu0 %242
        %v244 = vsel %vm240, %v234, -inf
        %245 = vmax.xlane.f32.xlu0 %v244
        %v246 = vpop.xlane.xlu0 %245
        %v247 = vsel %vm240, %v235, -inf
        %248 = vmax.xlane.f32.xlu0 %v247
        %v249 = vpop.xlane.xlu0 %248
        %v250 = vsub.f32 %v233, %v243
        %v251 = vsub.f32 %v234, %v246
        %v252 = vsub.f32 %v235, %v249
        %v253 = vmul.f32 %v250, 1.442695
        %v254 = vpow.pop %v253
        %v255 = vmul.f32 %v251, 1.442695
        %v256 = vpow.pop %v255
        %v257 = vmul.f32 %v252, 1.442695
        %v258 = vpow.pop %v257
        %v259 = vsel %vm240, %v254, 0.0
        %260 = vadd.xlane.f32.xlu0 %v259
        %v261 = vpop.xlane.xlu0 %260
        %v262 = vsel %vm240, %v256, 0.0
        %263 = vadd.xlane.f32.xlu0 %v262
        %v264 = vpop.xlane.xlu0 %263
        %v265 = vsel %vm240, %v258, 0.0
        %266 = vadd.xlane.f32.xlu0 %v265
        %v267 = vpop.xlane.xlu0 %266
        %v268 = vlog2.pop %v261
        %v269 = vmul.f32 %v268, 0.6931472
        %v270 = vlog2.pop %v264
        %v271 = vmul.f32 %v270, 0.6931472
        %v272 = vlog2.pop %v267
        %v273 = vmul.f32 %v272, 0.6931472
        %v274 = vadd.f32 %v243, %v269
        %v275 = vadd.f32 %v246, %v271
        %v276 = vadd.f32 %v249, %v273
        %v277 = vlaneseq
        %v278 = vand.u32 %v277, 127
        %279 = vset.pattern.permute.xlu0 0
        %280 = vperm.xlu0 %279, %v236
        %v281 = vpop.permute.xlu0 %280
        %282 = vset.pattern.permute.xlu0 0
        %283 = vperm.xlu0 %282, %v237
        %v284 = vpop.permute.xlu0 %283
        %285 = vset.pattern.permute.xlu0 0
        %286 = vperm.xlu0 %285, %v238
        %v287 = vpop.permute.xlu0 %286
        %vm288 = vcmp.eq.s32.totalorder %v278, %v281
        %vm289 = vcmp.eq.s32.totalorder %v278, %v284
        %vm290 = vcmp.eq.s32.totalorder %v278, %v287
        %v292 = vlaneseq
        %v293 = vshrl.u32 %v292, 7
        %v294 = vsub.s32 0, %v293
        %v295 = vrot.slane %v239, %v294
        %v297 = vsub.f32 %v274, %v233
        %v298 = vsub.f32 %v275, %v234
        %v299 = vsub.f32 %v276, %v235
        %v300 = vmul.f32 %v297, %v295
        %v301 = vmul.f32 %v298, %v295
        %v302 = vmul.f32 %v299, %v295
        %v303 = vsel %vm288, %v300, 0.0
        %v304 = vsel %vm289, %v301, 0.0
        %v305 = vsel %vm290, %v302, 0.0
        %v306 = vsel %vm240, %v303, 0.0
        %307 = vadd.xlane.f32.xlu0 %v306
        %v308 = vpop.xlane.xlu0 %307
        %v309 = vsel %vm240, %v304, 0.0
        %310 = vadd.xlane.f32.xlu0 %v309
        %v311 = vpop.xlane.xlu0 %310
        %v312 = vsel %vm240, %v305, 0.0
        %313 = vadd.xlane.f32.xlu0 %v312
        %v314 = vpop.xlane.xlu0 %313
        %v315 = vsel %vm288, %v295, 0.0
        %v316 = vsel %vm289, %v295, 0.0
        %v317 = vsel %vm290, %v295, 0.0
        %v318 = vsel %vm240, %v315, 0.0
        %319 = vadd.xlane.f32.xlu0 %v318
        %v320 = vpop.xlane.xlu0 %319
        %v321 = vsel %vm240, %v316, 0.0
        %322 = vadd.xlane.f32.xlu0 %v321
        %v323 = vpop.xlane.xlu0 %322
        %v324 = vsel %vm240, %v317, 0.0
        %325 = vadd.xlane.f32.xlu0 %v324
        %v326 = vpop.xlane.xlu0 %325
        %v327 = vld [vmem:[#allocation2] sm:$0xff]
        %v328 = vld [vmem:[#allocation2 + $0x8] sm:$0xff]
        %v329 = vld [vmem:[#allocation2 + $0x10] sm:$0xff]
        %v330 = vadd.f32 %v327, %v308
        %v331 = vadd.f32 %v328, %v311
        %v332 = vadd.f32 %v329, %v314
        %vm333 = vcmask 7168
        %334 = vst.msk [vmem:[#allocation2] sm:$0xff] %vm333, %v330
        %335 = vst.msk [vmem:[#allocation2 + $0x8] sm:$0xff] %vm333, %v331
        %336 = vst.msk [vmem:[#allocation2 + $0x10] sm:$0xff] %vm333, %v332
        %v337 = vld [vmem:[#allocation3] sm:$0xff]
        %v338 = vld [vmem:[#allocation3 + $0x8] sm:$0xff]
        %v339 = vld [vmem:[#allocation3 + $0x10] sm:$0xff]
        %v340 = vadd.f32 %v337, %v320
        %v341 = vadd.f32 %v338, %v323
        %v342 = vadd.f32 %v339, %v326
        %343 = vst.msk [vmem:[#allocation3] sm:$0xff] %vm333, %v340
        %344 = vst.msk [vmem:[#allocation3 + $0x8] sm:$0xff] %vm333, %v341
        %345 = vst.msk [vmem:[#allocation3 + $0x10] sm:$0xff] %vm333, %v342
        // Predicated region
        $region37: #{tpu_custom_call.1} parent=31 // pred_check
          %p346 = pneg %p219
        $region38: #{tpu_custom_call.1} parent=31 // pred_check_branch
          %348 = sbr.rel (%p346) target = $region40
        $region39: #{tpu_custom_call.1} parent=31 // pred_region
          %v349 = vld [vmem:[#allocation2] sm:$0xff]
          %v350 = vld [vmem:[#allocation2 + $0x8] sm:$0xff]
          %v351 = vld [vmem:[#allocation2 + $0x10] sm:$0xff]
          %v352 = vsel %vm333, %v349, 0.0
          %v353 = vsel %vm333, %v350, 0.0
          %v354 = vadd.f32 %v352, %v353
          %v355 = vsel %vm333, %v351, 0.0
          %v356 = vadd.f32 %v354, %v355
          %357 = vadd.xlane.f32.xlu0 %v356
          %v358 = vpop.xlane.xlu0 %357
          %v359 = vrot.slane %v358, 4
          %v360 = vadd.f32 %v358, %v359
          %v361 = vrot.slane %v360, 2
          %v362 = vadd.f32 %v360, %v361
          %v363 = vrot.slane %v362, 1
          %v364 = vadd.f32 %v362, %v363
          %s365 = vtos %v364
          %v366 = vld [vmem:[#allocation3] sm:$0xff]
          %v367 = vld [vmem:[#allocation3 + $0x8] sm:$0xff]
          %v368 = vld [vmem:[#allocation3 + $0x10] sm:$0xff]
          %v369 = vsel %vm333, %v366, 0.0
          %v370 = vsel %vm333, %v367, 0.0
          %v371 = vadd.f32 %v369, %v370
          %v372 = vsel %vm333, %v368, 0.0
          %v373 = vadd.f32 %v371, %v372
          %374 = vadd.xlane.f32.xlu0 %v373
          %v375 = vpop.xlane.xlu0 %374
          %v376 = vrot.slane %v375, 4
          %v377 = vadd.f32 %v375, %v376
          %v378 = vrot.slane %v377, 2
          %v379 = vadd.f32 %v377, %v378
          %v380 = vrot.slane %v379, 1
          %v381 = vadd.f32 %v379, %v380
          %s382 = vtos %v381
          %v383 = vlaneseq
          %v384 = vshrl.u32 %v383, 7
          %vm385 = vcmp.eq.s32.totalorder %v384, 0
          %vm386 = vcmp.eq.s32.totalorder %v384, 1
          %v387 = vstv %s382
          %v388 = vsel %vm386, %v387, 0.0
          %v389 = vstv %s365
          %v390 = vsel %vm385, %v389, %v388
          %391 = vst [vmem:[%s202] sm:$0xff] %v390
        $region40: #{tpu_custom_call.1} parent=31 // pred_fallthru
          _
        %s392 = sand.u32 %s114, 1
        %s393 = scalar_lea.sflag [#allocation5], %s392
        %s394 = sand.u32 %s114, 1
        %s395 = smul.addr %s394, 8
        %s396 = scalar_lea.vmem [#allocation4], %s395
        // Predicated region
        $region41: #{tpu_custom_call.1} parent=31 // pred_check
          %p397 = pneg %p124
        $region42: #{tpu_custom_call.1} parent=31 // pred_check_branch
          %399 = sbr.rel (%p397) target = $region44
        $region43: #{tpu_custom_call.1} parent=31 // pred_region
          %s401 = ssub.s32 128, 128
          %402 = vsyncadd %s393, %s401
          %s403 = smul.addr %s21, 128
          %s404 = scalar_lea.hbm %s3, %s403
          %s406 = sshll.u32 %s396, 4
          %s407 = int_to_ptr.vmem [resolvable:$true] %s406
          %409 = dma.vmem_to_hbm [thread:$0]  %s407, 128, %s404, %s393
        $region44: #{tpu_custom_call.1} parent=31 // pred_fallthru
          _
      $region32: #{tpu_custom_call.1} parent=5 // pred_fallthru
        _
      %p410 = scmp.le.s32.totalorder 2, %s12
      // Predicated region
      $region45: #{tpu_custom_call.1} parent=5 // pred_check
        %p411 = pneg %p410
      $region46: #{tpu_custom_call.1} parent=5 // pred_check_branch
        %413 = sbr.rel (%p411) target = $region48
      $region47: #{tpu_custom_call.1} parent=5 // pred_region
        %s414 = ssub.s32 %s12, 2
        // Predicated region
        $region49: #{tpu_custom_call.1} parent=47 // pred_check
          %p415 = pneg %p130
        $region50: #{tpu_custom_call.1} parent=47 // pred_check_branch
          %417 = sbr.rel (%p415) target = $region52
        $region51: #{tpu_custom_call.1} parent=47 // pred_region
          %s418 = sand.u32 %s115, 1
          %s419 = scalar_lea.sflag [#allocation5], %s418
          %s420 = sand.u32 %s115, 1
          %s421 = smul.addr %s420, 8
          %s422 = scalar_lea.vmem [#allocation4], %s421
          %423 = dma.done %s419, 128
        $region52: #{tpu_custom_call.1} parent=47 // pred_fallthru
          _
      $region48: #{tpu_custom_call.1} parent=5 // pred_fallthru
        _
    $region6: #{tpu_custom_call.1} parent=1 // loop_footer
      %s16 = sadd.s32 1, %s12
    $region7: #{tpu_custom_call.1} parent=1 // loop_footer_branch
      %11 = sbr.rel target = $region3
    $region8: #{tpu_custom_call.1} parent=1 // loop_exit
      _
    %424 = vsyncpa [#allocation5], 1
    %s425 = scalar_lea.sflag [#allocation5], 1
    %426 = vsyncpa %s425, 1

</llo_original>
